<compile_context>
chip_gen: v7x
topology: tpu7x:2x2x1
jax: 0.10.0
libtpu: 0.0.40
codegen_flags: <defaults>
</compile_context>

<pallas_src>
import math

import jax
import jax.numpy as jnp
from jax.experimental import pallas as pl
from jax.experimental.pallas import tpu as pltpu


# ---------------------------------------------------------------- kernel ----

def pe_add_kernel(x_ref, pe_ref, o_ref):
    # x_ref: (TILE_B, TILE_SD), pe_ref: (1, TILE_SD) -> broadcast add over batch.
    o_ref[...] = x_ref[...] + pe_ref[...]


# -------------------------------------------------------------- wrappers ----

def make_positional_encoding(d_model, max_len=400, dtype=jnp.float32):
    """Exact replica of the PyTorch buffer: pe[pos, 2i]=sin, pe[pos, 2i+1]=cos."""
    position = jnp.arange(max_len, dtype=jnp.float32)[:, None]
    div_term = jnp.exp(
        jnp.arange(0, d_model, 2, dtype=jnp.float32) * (-math.log(10000.0) / d_model))
    angles = position * div_term                        # (max_len, d_model // 2)
    pe = jnp.zeros((max_len, d_model), dtype=jnp.float32)
    pe = pe.at[:, 0::2].set(jnp.sin(angles))
    pe = pe.at[:, 1::2].set(jnp.cos(angles))
    return pe.astype(dtype)


def positional_encoding_forward(x, pe, *, tile_b=8, tile_sd=2048):
    """Fused `x + pe[:, :S]` in one row-tiled, double-buffered Pallas call.

    Dropout is identity in eval mode.
    TODO(synk): training-mode dropout (pltpu.prng_seed / stateful_bernoulli)
    is not modeled; this implements the eval-mode forward pass.
    """
    B, S, D = x.shape
    SD = S * D
    x2d = x.reshape(B, SD)                    # lane-dense view: last dim = S*D
    pe2d = pe[:S].reshape(1, SD)              # broadcast over batch inside kernel

    # Block dims must be a multiple of (8, 128) or equal the full array dims.
    tb = B if B <= tile_b else tile_b         # tile_b default 8 (sublane aligned)
    tsd = SD if SD <= tile_sd else tile_sd    # tile_sd default 2048 (128-multiple)
    grid = (pl.cdiv(B, tb), pl.cdiv(SD, tsd))

    out2d = pl.pallas_call(
        pe_add_kernel,
        out_shape=jax.ShapeDtypeStruct((B, SD), x.dtype),
        grid=grid,
        in_specs=[
            pl.BlockSpec((tb, tsd), lambda i, j: (i, j)),
            pl.BlockSpec((1, tsd), lambda i, j: (0, j)),   # pe: resident across batch tiles
        ],
        out_specs=pl.BlockSpec((tb, tsd), lambda i, j: (i, j)),
        compiler_params=pltpu.CompilerParams(
            dimension_semantics=("parallel", "parallel"),
            vmem_limit_bytes=32 * 1024 * 1024,
        ),
    )(x2d, pe2d)
    return out2d.reshape(B, S, D)


# ------------------------------------------------------------------- main ---

if __name__ == "__main__":
    B, S, D = 2, 8, 32          # batch, seq, d_model
    max_len = 400               # matches the PyTorch module default
    key = jax.random.PRNGKey(0)

    x = jax.random.normal(key, (B, S, D), dtype=jnp.float32)
    pe = make_positional_encoding(D, max_len=max_len)

    out = positional_encoding_forward(x, pe)
    out = jax.block_until_ready(out)

    # Pure-JAX reference: x + pe[:, :S]  (dropout = identity in eval mode).
    out_ref = x + pe[None, :S, :]
    assert out.shape == (B, S, D)
    assert jnp.allclose(out, out_ref, atol=1e-6, rtol=1e-6), "mismatch vs reference"

    print("KERNEL_OK")
</pallas_src>

<mosaic_0001>
module attributes {stable_mosaic.version = 11 : i64} {
  func.func @pe_add_kernel(%arg0: i32, %arg1: i32, %arg2: memref<2x256xf32, #tpu.memory_space<vmem>>, %arg3: memref<1x256xf32, #tpu.memory_space<vmem>>, %arg4: memref<2x256xf32, #tpu.memory_space<vmem>>) attributes {dimension_semantics = [#tpu.dimension_semantics<parallel>, #tpu.dimension_semantics<parallel>], iteration_bounds = array<i64: 1, 1>, scalar_prefetch = 0 : i64, scratch_operands = 0 : i64, tpu.core_type = #tpu.core_type<tc>, window_params = [{transform_indices = @transform_0, window_bounds = array<i64: 2, 256>}, {transform_indices = @transform_1, window_bounds = array<i64: 1, 256>}, {transform_indices = @transform_2, window_bounds = array<i64: 2, 256>}]} {
    %c0 = arith.constant 0 : index
    %c0_0 = arith.constant 0 : index
    %0 = vector.load %arg2[%c0, %c0_0] : memref<2x256xf32, #tpu.memory_space<vmem>>, vector<2x256xf32>
    %c0_1 = arith.constant 0 : index
    %c0_2 = arith.constant 0 : index
    %1 = vector.load %arg3[%c0_1, %c0_2] : memref<1x256xf32, #tpu.memory_space<vmem>>, vector<1x256xf32>
    %2 = vector.broadcast %1 : vector<1x256xf32> to vector<2x256xf32>
    %3 = arith.addf %0, %2 : vector<2x256xf32>
    %c0_3 = arith.constant 0 : index
    %c0_4 = arith.constant 0 : index
    %4 = vector.load %arg4[%c0_3, %c0_4] : memref<2x256xf32, #tpu.memory_space<vmem>>, vector<2x256xf32>
    tpu.vector_store %arg4[%c0_3, %c0_4], %3 {strides = array<i32>} : memref<2x256xf32, #tpu.memory_space<vmem>>, vector<2x256xf32>,
    return
  }
  func.func @transform_0(%arg0: i32, %arg1: i32) -> (i32, i32) {
    %c0_i32 = arith.constant 0 : i32
    return %arg0, %arg1 : i32, i32
  }
  func.func @transform_1(%arg0: i32, %arg1: i32) -> (i32, i32) {
    %c0_i32 = arith.constant 0 : i32
    %c0_i32_0 = arith.constant 0 : i32
    return %c0_i32, %arg1 : i32, i32
  }
  func.func @transform_2(%arg0: i32, %arg1: i32) -> (i32, i32) {
    %c0_i32 = arith.constant 0 : i32
    return %arg0, %arg1 : i32, i32
  }
}

</mosaic_0001>

<llo_original>
// kernel: tpu_custom_call.1
$region0: #{tpu_custom_call.1}
  #allocation0 [shape = 'u32[]', space=smem, size = 0x4, offset = 0x4, fixed_abs, tag = 'smem constant byte address 0x4 - core index']
  #allocation1 [shape = 'u32[144,128]{1,0:T(1,128)}', space=vmem, size = 0x12000, scoped, tag = 'internal scratch']
  %s0 = inlined_call_operand.hbm [shape: f32[2,256], index: 0, kind: input, shape index: {}]
  %s1 = inlined_call_operand.vmem [shape: f32[1,256], index: 1, kind: input, shape index: {}]
  %s2 = inlined_call_operand.hbm [shape: f32[2,256], index: 2, kind: output, shape index: {}]
  %s3 = sld [smem:[#allocation0]]
  $region22: #{tpu_custom_call.1} parent=0
    _
  %s5 = ssub.s32 1, %s3
  %s6 = scalar_select 0, %s5, %s3
  $region1: #{tpu_custom_call.1} parent=0
    #allocation2 [shape = 'u8[2048]{0}', space=vmem, size = 0x800, scoped, tag = 'input window, operand 0, single buffered']
    #allocation3 [shape = 's32[1]{0}', space=sflag, size = 0x4, scoped, tag = 'scoped memory for tpu_custom_call.1']
    #allocation4 [shape = 's32[1]{0}', space=sflag, size = 0x4, scoped, tag = 'scoped memory for tpu_custom_call.1']
    #allocation5 [shape = 'u8[2048]{0}', space=vmem, size = 0x800, scoped, tag = 'output window, operand 0, single buffered']
    %7 = vsyncpa [#allocation3], 0
    %8 = vsyncpa [#allocation4], 0
    // Predicated region
    $region2: #{tpu_custom_call.1} parent=1 // pred_check
      _
    $region3: #{tpu_custom_call.1} parent=1 // pred_check_branch
      %10 = sbr.rel (0) target = $region5
    $region4: #{tpu_custom_call.1} parent=1 // pred_region
      %s12 = ssub.s32 64, 64
      %13 = vsyncadd [#allocation3], %s12
      %s15 = sshll.u32 [#allocation2], 4
      %s16 = int_to_ptr.vmem [resolvable:$true] %s15
      %18 = dma.hbm_to_vmem [thread:$0]  %s0, 64, %s16, [#allocation3]
    $region5: #{tpu_custom_call.1} parent=1 // pred_fallthru
      _
    // Predicated region
    $region6: #{tpu_custom_call.1} parent=1 // pred_check
      _
    $region7: #{tpu_custom_call.1} parent=1 // pred_check_branch
      %20 = sbr.rel (0) target = $region9
    $region8: #{tpu_custom_call.1} parent=1 // pred_region
      _
    $region9: #{tpu_custom_call.1} parent=1 // pred_fallthru
      _
    // Predicated region
    $region10: #{tpu_custom_call.1} parent=1 // pred_check
      _
    $region11: #{tpu_custom_call.1} parent=1 // pred_check_branch
      %22 = sbr.rel (0) target = $region13
    $region12: #{tpu_custom_call.1} parent=1 // pred_region
      %23 = dma.done [#allocation3], 64
    $region13: #{tpu_custom_call.1} parent=1 // pred_fallthru
      _
    %v24 = vld [vmem:[#allocation2] sm:$0xf]
    %v25 = vld [vmem:[%s1] sm:$0x3]
    %v27 = vlaneseq
    %v28 = vshrl.u32 %v27, 7
    %v29 = vsub.s32 0, %v28
    %v30 = vrot.slane %v25, %v29
    %v31 = vlaneseq
    %v32 = vshrl.u32 %v31, 7
    %v33 = vsub.s32 1, %v32
    %v34 = vrot.slane %v25, %v33
    %v35 = vcombine.low %v30, %v34
    %v37 = vunpack.c.l.s4 1983009808
    %v38 = vunpack.c.0.s8 %v37
    %v39 = vlaneseq
    %v40 = vshrl.u32 %v39, 7
    %v41 = vsub.s32 %v38, %v40
    %v42 = vrot.slane %v35, %v41
    %v44 = vadd.f32 %v24, %v42
    %45 = vst [vmem:[#allocation5] sm:$0xf] %v44
    // Predicated region
    $region14: #{tpu_custom_call.1} parent=1 // pred_check
      _
    $region15: #{tpu_custom_call.1} parent=1 // pred_check_branch
      %47 = sbr.rel (0) target = $region17
    $region16: #{tpu_custom_call.1} parent=1 // pred_region
      %s49 = ssub.s32 64, 64
      %50 = vsyncadd [#allocation4], %s49
      %s52 = sshll.u32 [#allocation5], 4
      %s53 = int_to_ptr.vmem [resolvable:$true] %s52
      %55 = dma.vmem_to_hbm [thread:$0]  %s53, 64, %s2, [#allocation4]
    $region17: #{tpu_custom_call.1} parent=1 // pred_fallthru
      _
    // Predicated region
    $region18: #{tpu_custom_call.1} parent=1 // pred_check
      _
    $region19: #{tpu_custom_call.1} parent=1 // pred_check_branch
      %57 = sbr.rel (0) target = $region21
    $region20: #{tpu_custom_call.1} parent=1 // pred_region
      %58 = dma.done [#allocation4], 64
    $region21: #{tpu_custom_call.1} parent=1 // pred_fallthru
      _
    %59 = vsyncpa [#allocation3], 1
    %60 = vsyncpa [#allocation4], 1

</llo_original>
